<compile_context>
chip_gen: v7x
topology: tpu7x:2x2x1
jax: 0.10.0
libtpu: 0.0.40
codegen_flags: <defaults>
</compile_context>

<pallas_src>
import functools

import jax
import jax.numpy as jnp
from jax import lax
from jax.experimental import pallas as pl
from jax.experimental.pallas import tpu as pltpu


def _round_up(x, m):
    return (x + m - 1) // m * m


def _scl_kernel(feat_r_ref, feat_c_ref, lab_r_ref, lab_c_ref, out_ref,
                denom_acc, sum_ml_acc, sum_m_acc,
                *, inv_temperature, b_actual, block_r, block_c, matmul_dtype):
    i = pl.program_id(0)            # row-block index ("parallel")
    j = pl.program_id(1)            # col-block index ("arbitrary", reduction)
    nc = pl.num_programs(1)

    @pl.when(j == 0)
    def _init():
        denom_acc[...] = jnp.zeros_like(denom_acc)
        sum_ml_acc[...] = jnp.zeros_like(sum_ml_acc)
        sum_m_acc[...] = jnp.zeros_like(sum_m_acc)

    # --- L2-normalize row / col feature tiles in f32 (rsqrt -> EUP slot). ---
    xr = feat_r_ref[...].astype(jnp.float32)                    # (tr, Dp)
    xc = feat_c_ref[...].astype(jnp.float32)                    # (tc, Dp)
    inv_r = lax.rsqrt(jnp.maximum(jnp.sum(xr * xr, axis=1, keepdims=True),
                                  1e-24))
    inv_c = lax.rsqrt(jnp.maximum(jnp.sum(xc * xc, axis=1, keepdims=True),
                                  1e-24))
    # Fold 1/temperature into the row operand: B*D muls instead of B^2 divides.
    lhs = xr * (inv_r * inv_temperature)
    rhs = xc * inv_c
    if matmul_dtype is not None:
        lhs = lhs.astype(matmul_dtype)
        rhs = rhs.astype(matmul_dtype)

    # (tr, tc) similarity tile on the MXU, f32 accumulation.
    logits = jnp.einsum("id,jd->ij", lhs, rhs,
                        preferred_element_type=jnp.float32)

    # Positive-pair mask: same label, not a self-pair, column inside real batch.
    lab_r = lab_r_ref[...]                                      # (tr, 1) int32
    lab_c = lab_c_ref[...]                                      # (1, tc) int32
    row_ids = i * block_r + lax.broadcasted_iota(jnp.int32, logits.shape, 0)
    col_ids = j * block_c + lax.broadcasted_iota(jnp.int32, logits.shape, 1)
    mask = (lab_r == lab_c) & (row_ids != col_ids) & (col_ids < b_actual)

    # Online per-row accumulation (no B^2 temporaries kept alive past here).
    denom_acc[...] += jnp.sum(jnp.where(mask, jnp.exp(logits), 0.0),
                              axis=1, keepdims=True)
    sum_ml_acc[...] += jnp.sum(jnp.where(mask, logits, 0.0),
                               axis=1, keepdims=True)
    sum_m_acc[...] += jnp.sum(mask.astype(jnp.float32), axis=1, keepdims=True)

    @pl.when(j == nc - 1)
    def _finalize():
        # sum(mask*log_prob)/sum(mask) = sum(mask*logits)/sum(mask) - log(denom)
        out_ref[...] = (sum_ml_acc[...] / sum_m_acc[...]
                        - jnp.log(denom_acc[...] + 1e-10))


def supervised_contrastive_loss(features, labels, temperature=0.07,
                                matmul_dtype=jnp.bfloat16):
    """features: (B, D) float (any dtype); labels: (B,) int. Returns f32 loss.

    matmul_dtype: dtype for the MXU similarity matmul (bf16 default, f32 accum).
    Pass None to keep the matmul fully in f32 (bit-near reference numerics).
    """
    B, D = features.shape

    # Lane-dense feature dim (multiple of 128); batch rounded for tiling.
    Dp = _round_up(D, 128)
    if B <= 256:                    # single row/col block
        Bp = _round_up(B, 8)
        block_r = Bp
        block_c = Bp
    else:                           # tiled: 256-row x 512-col logits tiles
        Bp = _round_up(B, 512)
        block_r = 256
        block_c = 512
    if (Bp, Dp) != (B, D):
        features = jnp.pad(features, ((0, Bp - B), (0, Dp - D)))

    labels = labels.astype(jnp.int32)
    if Bp != B:
        labels = jnp.pad(labels, (0, Bp - B), constant_values=-1)
    lab_anchor = labels.reshape(Bp, 1)      # per-row labels
    lab_contrast = labels.reshape(1, Bp)    # per-col labels

    nr = Bp // block_r
    nc = Bp // block_c

    kernel = functools.partial(
        _scl_kernel,
        inv_temperature=float(1.0 / temperature),
        b_actual=B,
        block_r=block_r,
        block_c=block_c,
        matmul_dtype=matmul_dtype,
    )

    mean_log_prob = pl.pallas_call(
        kernel,
        out_shape=jax.ShapeDtypeStruct((Bp, 1), jnp.float32),
        grid_spec=pltpu.PrefetchScalarGridSpec(
            num_scalar_prefetch=0,
            grid=(nr, nc),
            in_specs=[
                pl.BlockSpec((block_r, Dp), lambda i, j: (i, 0)),   # row feats
                pl.BlockSpec((block_c, Dp), lambda i, j: (j, 0)),   # col feats
                pl.BlockSpec((block_r, 1), lambda i, j: (i, 0)),    # row labels
                pl.BlockSpec((1, block_c), lambda i, j: (0, j)),    # col labels
            ],
            out_specs=pl.BlockSpec((block_r, 1), lambda i, j: (i, 0)),
            scratch_shapes=[pltpu.VMEM((block_r, 1), jnp.float32)] * 3,
        ),
        compiler_params=pltpu.CompilerParams(
            dimension_semantics=("parallel", "arbitrary")),
    )(features, features, lab_anchor, lab_contrast)

    # Tiny final reduction over the real (un-padded) rows.
    return -jnp.mean(mean_log_prob[:B, 0])


def _reference_loss(features, labels, temperature=0.07):
    """Pure-JAX reference mirroring the PyTorch module (f32 throughout)."""
    x = features.astype(jnp.float32)
    norm = jnp.sqrt(jnp.sum(x * x, axis=1, keepdims=True))
    xn = x / jnp.maximum(norm, 1e-12)
    B = labels.shape[0]
    mask = (labels[:, None] == labels[None, :]).astype(jnp.float32)
    logits = (xn @ xn.T) / temperature
    mask = mask * (1.0 - jnp.eye(B, dtype=jnp.float32))
    exp_logits = jnp.exp(logits) * mask
    log_prob = logits - jnp.log(jnp.sum(exp_logits, axis=1, keepdims=True)
                                + 1e-10)
    mean_log_prob = jnp.sum(mask * log_prob, axis=1) / jnp.sum(mask, axis=1)
    return -jnp.mean(mean_log_prob)


if __name__ == "__main__":
    key = jax.random.PRNGKey(0)
    B, D = 8, 32
    features = jax.random.normal(key, (B, D), dtype=jnp.float32)
    # Two classes, four samples each -> every anchor has 3 positives.
    labels = jnp.array([0, 0, 1, 1, 0, 0, 1, 1], dtype=jnp.int32)

    # Default perf configuration: bf16 MXU operands, f32 accumulation.
    loss_bf16 = jax.block_until_ready(
        supervised_contrastive_loss(features, labels, temperature=0.07))
    # Full-f32 matmul path (matches reference numerics closely).
    loss_f32 = jax.block_until_ready(
        supervised_contrastive_loss(features, labels, temperature=0.07,
                                    matmul_dtype=None))

    ref = _reference_loss(features, labels, temperature=0.07)
    assert bool(jnp.isfinite(loss_f32)) and bool(jnp.isfinite(loss_bf16))
    assert jnp.allclose(loss_f32, ref, rtol=1e-4, atol=1e-4), (loss_f32, ref)
    assert jnp.allclose(loss_bf16, ref, rtol=5e-2, atol=5e-2), (loss_bf16, ref)
    print("KERNEL_OK")
</pallas_src>

<mosaic_0001>
module attributes {stable_mosaic.version = 11 : i64} {
  func.func @_scl_kernel(%arg0: i32, %arg1: i32, %arg2: memref<8x128xf32, #tpu.memory_space<vmem>>, %arg3: memref<8x128xf32, #tpu.memory_space<vmem>>, %arg4: memref<8x1xi32, #tpu.memory_space<vmem>>, %arg5: memref<1x8xi32, #tpu.memory_space<vmem>>, %arg6: memref<8x1xf32, #tpu.memory_space<vmem>>, %arg7: memref<8x1xf32, #tpu.memory_space<vmem>>, %arg8: memref<8x1xf32, #tpu.memory_space<vmem>>, %arg9: memref<8x1xf32, #tpu.memory_space<vmem>>) attributes {dimension_semantics = [#tpu.dimension_semantics<parallel>, #tpu.dimension_semantics<arbitrary>], iteration_bounds = array<i64: 1, 1>, scalar_prefetch = 0 : i64, scratch_operands = 3 : i64, tpu.core_type = #tpu.core_type<tc>, window_params = [{transform_indices = @transform_0, window_bounds = array<i64: 8, 128>}, {transform_indices = @transform_1, window_bounds = array<i64: 8, 128>}, {transform_indices = @transform_2, window_bounds = array<i64: 8, 1>}, {transform_indices = @transform_3, window_bounds = array<i64: 1, 8>}, {transform_indices = @transform_4, window_bounds = array<i64: 8, 1>}]} {
    %c0_i32 = arith.constant 0 : i32
    %0 = arith.cmpi eq, %arg1, %c0_i32 : i32
    %1 = arith.extui %0 : i1 to i32
    %c0_i32_0 = arith.constant 0 : i32
    %2 = arith.cmpi ne, %1, %c0_i32_0 : i32
    scf.if %2 {
      %cst_34 = arith.constant 0.000000e+00 : f32
      %69 = vector.broadcast %cst_34 : f32 to vector<8x1xf32>
      %c0_35 = arith.constant 0 : index
      %c0_36 = arith.constant 0 : index
      %70 = vector.load %arg7[%c0_35, %c0_36] : memref<8x1xf32, #tpu.memory_space<vmem>>, vector<8x1xf32>
      tpu.vector_store %arg7[%c0_35, %c0_36], %69 {strides = array<i32>} : memref<8x1xf32, #tpu.memory_space<vmem>>, vector<8x1xf32>,
      %cst_37 = arith.constant 0.000000e+00 : f32
      %71 = vector.broadcast %cst_37 : f32 to vector<8x1xf32>
      %c0_38 = arith.constant 0 : index
      %c0_39 = arith.constant 0 : index
      %72 = vector.load %arg8[%c0_38, %c0_39] : memref<8x1xf32, #tpu.memory_space<vmem>>, vector<8x1xf32>
      tpu.vector_store %arg8[%c0_38, %c0_39], %71 {strides = array<i32>} : memref<8x1xf32, #tpu.memory_space<vmem>>, vector<8x1xf32>,
      %cst_40 = arith.constant 0.000000e+00 : f32
      %73 = vector.broadcast %cst_40 : f32 to vector<8x1xf32>
      %c0_41 = arith.constant 0 : index
      %c0_42 = arith.constant 0 : index
      %74 = vector.load %arg9[%c0_41, %c0_42] : memref<8x1xf32, #tpu.memory_space<vmem>>, vector<8x1xf32>
      tpu.vector_store %arg9[%c0_41, %c0_42], %73 {strides = array<i32>} : memref<8x1xf32, #tpu.memory_space<vmem>>, vector<8x1xf32>,
    } else {
    }
    %c0 = arith.constant 0 : index
    %c0_1 = arith.constant 0 : index
    %3 = vector.load %arg2[%c0, %c0_1] : memref<8x128xf32, #tpu.memory_space<vmem>>, vector<8x128xf32>
    %c0_2 = arith.constant 0 : index
    %c0_3 = arith.constant 0 : index
    %4 = vector.load %arg3[%c0_2, %c0_3] : memref<8x128xf32, #tpu.memory_space<vmem>>, vector<8x128xf32>
    %5 = arith.mulf %3, %3 : vector<8x128xf32>
    %cst = arith.constant dense<0.000000e+00> : vector<8xf32>
    %6 = vector.multi_reduction <add>, %5, %cst [1] : vector<8x128xf32> to vector<8xf32>
    %7 = vector.shape_cast %6 : vector<8xf32> to vector<8x1xf32>
    %cst_4 = arith.constant 1.000000e-24 : f32
    %8 = vector.broadcast %cst_4 : f32 to vector<8x1xf32>
    %9 = arith.maximumf %7, %8 : vector<8x1xf32>
    %10 = math.rsqrt %9 : vector<8x1xf32>
    %11 = arith.mulf %4, %4 : vector<8x128xf32>
    %cst_5 = arith.constant dense<0.000000e+00> : vector<8xf32>
    %12 = vector.multi_reduction <add>, %11, %cst_5 [1] : vector<8x128xf32> to vector<8xf32>
    %13 = vector.shape_cast %12 : vector<8xf32> to vector<8x1xf32>
    %cst_6 = arith.constant 1.000000e-24 : f32
    %14 = vector.broadcast %cst_6 : f32 to vector<8x1xf32>
    %15 = arith.maximumf %13, %14 : vector<8x1xf32>
    %16 = math.rsqrt %15 : vector<8x1xf32>
    %cst_7 = arith.constant 14.2857141 : f32
    %17 = vector.broadcast %cst_7 : f32 to vector<8x1xf32>
    %18 = arith.mulf %10, %17 : vector<8x1xf32>
    %19 = vector.broadcast %18 : vector<8x1xf32> to vector<8x128xf32>
    %20 = arith.mulf %3, %19 : vector<8x128xf32>
    %21 = vector.broadcast %16 : vector<8x1xf32> to vector<8x128xf32>
    %22 = arith.mulf %4, %21 : vector<8x128xf32>
    %23 = arith.truncf %20 : vector<8x128xf32> to vector<8x128xbf16>
    %24 = arith.truncf %22 : vector<8x128xf32> to vector<8x128xbf16>
    "tpu.trace_start"() <{level = 10 : i32, message = "id,jd->ij"}> : () -> ()
    %cst_8 = arith.constant dense<0.000000e+00> : vector<8x8xf32>
    %25 = tpu.matmul %23, %24, %cst_8 {dimension_numbers = #tpu.dot_dimension_numbers<[1], [1], [0], [0], [0, 0, 1, 0], [], []>} : vector<8x128xbf16>, vector<8x128xbf16>, vector<8x8xf32> -> vector<8x8xf32>
    "tpu.trace_stop"() : () -> ()
    %c0_9 = arith.constant 0 : index
    %c0_10 = arith.constant 0 : index
    %26 = vector.load %arg4[%c0_9, %c0_10] : memref<8x1xi32, #tpu.memory_space<vmem>>, vector<8x1xi32>
    %c0_11 = arith.constant 0 : index
    %c0_12 = arith.constant 0 : index
    %27 = vector.load %arg5[%c0_11, %c0_12] : memref<1x8xi32, #tpu.memory_space<vmem>>, vector<1x8xi32>
    %c8_i32 = arith.constant 8 : i32
    %28 = arith.muli %arg0, %c8_i32 : i32
    %29 = tpu.iota {dimensions = array<i32: 0>} : vector<8x8xi32>
    %30 = vector.broadcast %28 : i32 to vector<8x8xi32>
    %31 = arith.addi %30, %29 : vector<8x8xi32>
    %c8_i32_13 = arith.constant 8 : i32
    %32 = arith.muli %arg1, %c8_i32_13 : i32
    %33 = tpu.iota {dimensions = array<i32: 1>} : vector<8x8xi32>
    %34 = vector.broadcast %32 : i32 to vector<8x8xi32>
    %35 = arith.addi %34, %33 : vector<8x8xi32>
    %36 = vector.broadcast %26 : vector<8x1xi32> to vector<8x8xi32>
    %37 = vector.broadcast %27 : vector<1x8xi32> to vector<8x8xi32>
    %38 = arith.cmpi eq, %36, %37 : vector<8x8xi32>
    %39 = arith.cmpi ne, %31, %35 : vector<8x8xi32>
    %40 = arith.andi %38, %39 : vector<8x8xi1>
    %c8_i32_14 = arith.constant 8 : i32
    %41 = vector.broadcast %c8_i32_14 : i32 to vector<8x8xi32>
    %42 = arith.cmpi slt, %35, %41 : vector<8x8xi32>
    %43 = arith.andi %40, %42 : vector<8x8xi1>
    %c0_15 = arith.constant 0 : index
    %c0_16 = arith.constant 0 : index
    %44 = vector.load %arg7[%c0_15, %c0_16] : memref<8x1xf32, #tpu.memory_space<vmem>>, vector<8x1xf32>
    %45 = math.exp %25 : vector<8x8xf32>
    %cst_17 = arith.constant 0.000000e+00 : f32
    %46 = vector.broadcast %cst_17 : f32 to vector<8x8xf32>
    %47 = arith.select %43, %45, %46 : vector<8x8xi1>, vector<8x8xf32>
    %cst_18 = arith.constant dense<0.000000e+00> : vector<8xf32>
    %48 = vector.multi_reduction <add>, %47, %cst_18 [1] : vector<8x8xf32> to vector<8xf32>
    %49 = vector.shape_cast %48 : vector<8xf32> to vector<8x1xf32>
    %50 = arith.addf %44, %49 : vector<8x1xf32>
    %c0_19 = arith.constant 0 : index
    %c0_20 = arith.constant 0 : index
    %51 = vector.load %arg7[%c0_19, %c0_20] : memref<8x1xf32, #tpu.memory_space<vmem>>, vector<8x1xf32>
    tpu.vector_store %arg7[%c0_19, %c0_20], %50 {strides = array<i32>} : memref<8x1xf32, #tpu.memory_space<vmem>>, vector<8x1xf32>,
    %c0_21 = arith.constant 0 : index
    %c0_22 = arith.constant 0 : index
    %52 = vector.load %arg8[%c0_21, %c0_22] : memref<8x1xf32, #tpu.memory_space<vmem>>, vector<8x1xf32>
    %cst_23 = arith.constant 0.000000e+00 : f32
    %53 = vector.broadcast %cst_23 : f32 to vector<8x8xf32>
    %54 = arith.select %43, %25, %53 : vector<8x8xi1>, vector<8x8xf32>
    %cst_24 = arith.constant dense<0.000000e+00> : vector<8xf32>
    %55 = vector.multi_reduction <add>, %54, %cst_24 [1] : vector<8x8xf32> to vector<8xf32>
    %56 = vector.shape_cast %55 : vector<8xf32> to vector<8x1xf32>
    %57 = arith.addf %52, %56 : vector<8x1xf32>
    %c0_25 = arith.constant 0 : index
    %c0_26 = arith.constant 0 : index
    %58 = vector.load %arg8[%c0_25, %c0_26] : memref<8x1xf32, #tpu.memory_space<vmem>>, vector<8x1xf32>
    tpu.vector_store %arg8[%c0_25, %c0_26], %57 {strides = array<i32>} : memref<8x1xf32, #tpu.memory_space<vmem>>, vector<8x1xf32>,
    %c0_27 = arith.constant 0 : index
    %c0_28 = arith.constant 0 : index
    %59 = vector.load %arg9[%c0_27, %c0_28] : memref<8x1xf32, #tpu.memory_space<vmem>>, vector<8x1xf32>
    %60 = arith.extui %43 : vector<8x8xi1> to vector<8x8xi32>
    %61 = arith.sitofp %60 : vector<8x8xi32> to vector<8x8xf32>
    %cst_29 = arith.constant dense<0.000000e+00> : vector<8xf32>
    %62 = vector.multi_reduction <add>, %61, %cst_29 [1] : vector<8x8xf32> to vector<8xf32>
    %63 = vector.shape_cast %62 : vector<8xf32> to vector<8x1xf32>
    %64 = arith.addf %59, %63 : vector<8x1xf32>
    %c0_30 = arith.constant 0 : index
    %c0_31 = arith.constant 0 : index
    %65 = vector.load %arg9[%c0_30, %c0_31] : memref<8x1xf32, #tpu.memory_space<vmem>>, vector<8x1xf32>
    tpu.vector_store %arg9[%c0_30, %c0_31], %64 {strides = array<i32>} : memref<8x1xf32, #tpu.memory_space<vmem>>, vector<8x1xf32>,
    %c0_i32_32 = arith.constant 0 : i32
    %66 = arith.cmpi eq, %arg1, %c0_i32_32 : i32
    %67 = arith.extui %66 : i1 to i32
    %c0_i32_33 = arith.constant 0 : i32
    %68 = arith.cmpi ne, %67, %c0_i32_33 : i32
    scf.if %68 {
      %c0_34 = arith.constant 0 : index
      %c0_35 = arith.constant 0 : index
      %69 = vector.load %arg8[%c0_34, %c0_35] : memref<8x1xf32, #tpu.memory_space<vmem>>, vector<8x1xf32>
      %c0_36 = arith.constant 0 : index
      %c0_37 = arith.constant 0 : index
      %70 = vector.load %arg9[%c0_36, %c0_37] : memref<8x1xf32, #tpu.memory_space<vmem>>, vector<8x1xf32>
      %71 = arith.divf %69, %70 : vector<8x1xf32>
      %c0_38 = arith.constant 0 : index
      %c0_39 = arith.constant 0 : index
      %72 = vector.load %arg7[%c0_38, %c0_39] : memref<8x1xf32, #tpu.memory_space<vmem>>, vector<8x1xf32>
      %cst_40 = arith.constant 1.000000e-10 : f32
      %73 = vector.broadcast %cst_40 : f32 to vector<8x1xf32>
      %74 = arith.addf %72, %73 : vector<8x1xf32>
      %75 = math.log %74 : vector<8x1xf32>
      %76 = arith.subf %71, %75 : vector<8x1xf32>
      %c0_41 = arith.constant 0 : index
      %c0_42 = arith.constant 0 : index
      %77 = vector.load %arg6[%c0_41, %c0_42] : memref<8x1xf32, #tpu.memory_space<vmem>>, vector<8x1xf32>
      tpu.vector_store %arg6[%c0_41, %c0_42], %76 {strides = array<i32>} : memref<8x1xf32, #tpu.memory_space<vmem>>, vector<8x1xf32>,
    } else {
    }
    return
  }
  func.func @transform_0(%arg0: i32, %arg1: i32) -> (i32, i32) {
    %c0_i32 = arith.constant 0 : i32
    %c0_i32_0 = arith.constant 0 : i32
    return %arg0, %c0_i32 : i32, i32
  }
  func.func @transform_1(%arg0: i32, %arg1: i32) -> (i32, i32) {
    %c0_i32 = arith.constant 0 : i32
    %c0_i32_0 = arith.constant 0 : i32
    return %arg1, %c0_i32 : i32, i32
  }
  func.func @transform_2(%arg0: i32, %arg1: i32) -> (i32, i32) {
    %c0_i32 = arith.constant 0 : i32
    %c0_i32_0 = arith.constant 0 : i32
    return %arg0, %c0_i32 : i32, i32
  }
  func.func @transform_3(%arg0: i32, %arg1: i32) -> (i32, i32) {
    %c0_i32 = arith.constant 0 : i32
    %c0_i32_0 = arith.constant 0 : i32
    return %c0_i32, %arg1 : i32, i32
  }
  func.func @transform_4(%arg0: i32, %arg1: i32) -> (i32, i32) {
    %c0_i32 = arith.constant 0 : i32
    %c0_i32_0 = arith.constant 0 : i32
    return %arg0, %c0_i32 : i32, i32
  }
}

</mosaic_0001>

<llo_original>
// kernel: tpu_custom_call.1
$region0: #{tpu_custom_call.1}
  #allocation0 [shape = 'u32[]', space=smem, size = 0x4, offset = 0x4, fixed_abs, tag = 'smem constant byte address 0x4 - core index']
  #allocation1 [shape = 'u32[144,128]{1,0:T(1,128)}', space=vmem, size = 0x12000, scoped, tag = 'internal scratch']
  #allocation2 [shape = 'f32[8,1]{1,0:T(8,128)}', space=vmem, size = 0x1000, scoped, tag = 'scratch operand']
  #allocation3 [shape = 'f32[8,1]{1,0:T(8,128)}', space=vmem, size = 0x1000, scoped, tag = 'scratch operand']
  #allocation4 [shape = 'f32[8,1]{1,0:T(8,128)}', space=vmem, size = 0x1000, scoped, tag = 'scratch operand']
  %s0 = inlined_call_operand.vmem [shape: f32[8,128], index: 0, kind: input, shape index: {}]
  %s1 = inlined_call_operand.hbm [shape: f32[8,128], index: 1, kind: input, shape index: {}]
  %s2 = inlined_call_operand.vmem [shape: s32[8,1], index: 2, kind: input, shape index: {}]
  %s3 = inlined_call_operand.vmem [shape: s32[1,8], index: 3, kind: input, shape index: {}]
  %s4 = inlined_call_operand.vmem [shape: f32[8,1], index: 4, kind: output, shape index: {}]
  %s5 = sld [smem:[#allocation0]]
  $region38: #{tpu_custom_call.1} parent=0
    _
  %s7 = ssub.s32 1, %s5
  %s8 = scalar_select 0, %s7, %s5
  $region1: #{tpu_custom_call.1} parent=0
    #allocation5 [shape = 'u8[4096]{0}', space=vmem, size = 0x1000, scoped, tag = 'input window, operand 1, single buffered']
    #allocation6 [shape = 's32[1]{0}', space=sflag, size = 0x4, scoped, tag = 'scoped memory for tpu_custom_call.1']
    %9 = vsyncpa [#allocation6], 0
    // Predicated region
    $region2: #{tpu_custom_call.1} parent=1 // pred_check
      _
    $region3: #{tpu_custom_call.1} parent=1 // pred_check_branch
      %11 = sbr.rel (0) target = $region5
    $region4: #{tpu_custom_call.1} parent=1 // pred_region
      _
    $region5: #{tpu_custom_call.1} parent=1 // pred_fallthru
      _
    // Predicated region
    $region6: #{tpu_custom_call.1} parent=1 // pred_check
      _
    $region7: #{tpu_custom_call.1} parent=1 // pred_check_branch
      %13 = sbr.rel (0) target = $region9
    $region8: #{tpu_custom_call.1} parent=1 // pred_region
      %s15 = ssub.s32 128, 128
      %16 = vsyncadd [#allocation6], %s15
      %s18 = sshll.u32 [#allocation5], 4
      %s19 = int_to_ptr.vmem [resolvable:$true] %s18
      %21 = dma.hbm_to_vmem [thread:$0]  %s1, 128, %s19, [#allocation6]
    $region9: #{tpu_custom_call.1} parent=1 // pred_fallthru
      _
    // Predicated region
    $region10: #{tpu_custom_call.1} parent=1 // pred_check
      _
    $region11: #{tpu_custom_call.1} parent=1 // pred_check_branch
      %23 = sbr.rel (0) target = $region13
    $region12: #{tpu_custom_call.1} parent=1 // pred_region
      _
    $region13: #{tpu_custom_call.1} parent=1 // pred_fallthru
      _
    // Predicated region
    $region14: #{tpu_custom_call.1} parent=1 // pred_check
      _
    $region15: #{tpu_custom_call.1} parent=1 // pred_check_branch
      %25 = sbr.rel (0) target = $region17
    $region16: #{tpu_custom_call.1} parent=1 // pred_region
      _
    $region17: #{tpu_custom_call.1} parent=1 // pred_fallthru
      _
    // Predicated region
    $region18: #{tpu_custom_call.1} parent=1 // pred_check
      _
    $region19: #{tpu_custom_call.1} parent=1 // pred_check_branch
      %27 = sbr.rel (0) target = $region21
    $region20: #{tpu_custom_call.1} parent=1 // pred_region
      %28 = dma.done [#allocation6], 128
    $region21: #{tpu_custom_call.1} parent=1 // pred_fallthru
      _
    %p30 = scmp.eq.s32.totalorder 0, 0
    // Predicated region
    $region22: #{tpu_custom_call.1} parent=1 // pred_check
      %p31 = pneg %p30
    $region23: #{tpu_custom_call.1} parent=1 // pred_check_branch
      %33 = sbr.rel (%p31) target = $region25
    $region24: #{tpu_custom_call.1} parent=1 // pred_region
      %vm34 = vcmask 7168
      %35 = vst.msk [vmem:[#allocation2] sm:$0xff] %vm34, 0.0
      %36 = vst.msk [vmem:[#allocation3] sm:$0xff] %vm34, 0.0
      %37 = vst.msk [vmem:[#allocation4] sm:$0xff] %vm34, 0.0
    $region25: #{tpu_custom_call.1} parent=1 // pred_fallthru
      _
    %v38 = vld [vmem:[%s0] sm:$0xff]
    %v39 = vld [vmem:[#allocation5] sm:$0xff]
    %v40 = vmul.f32 %v38, %v38
    %41 = vadd.xlane.f32.xlu0 %v40
    %v42 = vpop.xlane.xlu0 %41
    %v43 = vmax.f32 %v42, 1e-24
    %v44 = vrsqrt.pop %v43
    %v45 = vmul.f32 %v39, %v39
    %46 = vadd.xlane.f32.xlu0 %v45
    %v47 = vpop.xlane.xlu0 %46
    %v48 = vmax.f32 %v47, 1e-24
    %v49 = vrsqrt.pop %v48
    %v50 = vmul.f32 %v44, 14.285714
    %v51 = vmul.f32 %v38, %v50
    %v52 = vmul.f32 %v39, %v49
    %v53 = vpack.c.bf16 %v51, %v51
    %v54 = vpack.c.bf16 %v52, %v52
    %55 = vmatprep.subr.bf16.mxu0 0
    %56 = vmatpush1.bf16.xpose.msra.mxu0 %v54
    %57 = vmatprep.subr.bf16.mxu0 0
    %58 = vmatpush1.bf16.xpose.msra.mxu0 0
    %59 = vmatprep.subr.bf16.mxu0 0
    %60 = vmatpush1.bf16.xpose.msra.mxu0 0
    %61 = vmatprep.subr.bf16.mxu0 0
    %62 = vmatpush1.bf16.xpose.msra.mxu0 0
    %63 = vmatprep.subr.bf16.mxu0 0
    %64 = vmatpush1.bf16.xpose.msra.mxu0 0
    %65 = vmatprep.subr.bf16.mxu0 0
    %66 = vmatpush1.bf16.xpose.msra.mxu0 0
    %67 = vmatprep.subr.bf16.mxu0 0
    %68 = vmatpush1.bf16.xpose.msra.mxu0 0
    %69 = vmatprep.subr.bf16.mxu0 0
    %70 = vmatpush1.bf16.xpose.msra.mxu0 0
    %71 = vmatprep.subr.bf16.mxu0 0
    %72 = vmatpush1.bf16.xpose.msra.mxu0 0
    %73 = vmatprep.subr.bf16.mxu0 0
    %74 = vmatpush1.bf16.xpose.msra.mxu0 0
    %75 = vmatprep.subr.bf16.mxu0 0
    %76 = vmatpush1.bf16.xpose.msra.mxu0 0
    %77 = vmatprep.subr.bf16.mxu0 0
    %78 = vmatpush1.bf16.xpose.msra.mxu0 0
    %79 = vmatprep.subr.bf16.mxu0 0
    %80 = vmatpush1.bf16.xpose.msra.mxu0 0
    %81 = vmatprep.subr.bf16.mxu0 0
    %82 = vmatpush1.bf16.xpose.msra.mxu0 0
    %83 = vmatprep.subr.bf16.mxu0 0
    %84 = vmatpush1.bf16.xpose.msra.mxu0 0
    %85 = vmatprep.subr.bf16.mxu0 0
    %86 = vmatpush1.bf16.xpose.msra.mxu0 0
    %87 = vmatprep.mubr.bf16.mxu0 0
    %88 = vmatmul.mubr.bf16.gmra.mrb[0].mxu0 %v53
    %v89 = vpop.f32.mrb[0].mxu0
    %v90 = vadd.f32 0.0, %v89
    %v91 = vpop.f32.mrb[0].mxu0
    %v92 = vpop.f32.mrb[0].mxu0
    %v93 = vpop.f32.mrb[0].mxu0
    %94 = vdwg.mxu0
    %v95 = vld [vmem:[%s2] sm:$0xff]
    %v96 = vld [vmem:[%s3] sm:$0x1]
    %s97 = smul.u32 0, 8
    %v98 = vlaneseq
    %v99 = vshrl.u32 %v98, 7
    %v100 = vstv %s97
    %v101 = vadd.s32 %v100, %v99
    %s102 = smul.u32 0, 8
    %v103 = vlaneseq
    %v104 = vand.u32 %v103, 127
    %v105 = vstv %s102
    %v106 = vadd.s32 %v105, %v104
    %107 = vset.pattern.permute.xlu0 0
    %108 = vperm.xlu0 %107, %v95
    %v109 = vpop.permute.xlu0 %108
    %v110 = vlaneseq
    %v111 = vshrl.u32 %v110, 7
    %v112 = vsub.s32 0, %v111
    %v113 = vrot.slane %v96, %v112
    %vm114 = vcmp.eq.s32.totalorder %v109, %v113
    %vm115 = vcmp.ne.s32.totalorder %v101, %v106
    %vm116 = vmand %vm114, %vm115
    %vm117 = vcmp.lt.s32.totalorder %v106, 8
    %vm118 = vmand %vm116, %vm117
    %v119 = vld [vmem:[#allocation2] sm:$0xff]
    %v120 = vmul.f32 %v90, 1.442695
    %v121 = vpow.pop %v120
    %v122 = vsel %vm118, %v121, 0.0
    %vm123 = vcmask 64512
    %v124 = vsel %vm123, %v122, 0.0
    %125 = vadd.xlane.f32.xlu0 %v124
    %v126 = vpop.xlane.xlu0 %125
    %v127 = vadd.f32 %v119, %v126
    %vm128 = vcmask 7168
    %129 = vst.msk [vmem:[#allocation2] sm:$0xff] %vm128, %v127
    %v130 = vld [vmem:[#allocation3] sm:$0xff]
    %v131 = vsel %vm118, %v90, 0.0
    %v132 = vsel %vm123, %v131, 0.0
    %133 = vadd.xlane.f32.xlu0 %v132
    %v134 = vpop.xlane.xlu0 %133
    %v135 = vadd.f32 %v130, %v134
    %136 = vst.msk [vmem:[#allocation3] sm:$0xff] %vm128, %v135
    %v137 = vld [vmem:[#allocation4] sm:$0xff]
    %v138 = vsel %vm118, 1, 0
    %v139 = vcvt.s32.f32 %v138
    %v140 = vsel %vm123, %v139, 0.0
    %141 = vadd.xlane.f32.xlu0 %v140
    %v142 = vpop.xlane.xlu0 %141
    %v143 = vadd.f32 %v137, %v142
    %144 = vst.msk [vmem:[#allocation4] sm:$0xff] %vm128, %v143
    // Predicated region
    $region26: #{tpu_custom_call.1} parent=1 // pred_check
      %p145 = pneg %p30
    $region27: #{tpu_custom_call.1} parent=1 // pred_check_branch
      %147 = sbr.rel (%p145) target = $region29
    $region28: #{tpu_custom_call.1} parent=1 // pred_region
      %v148 = vld [vmem:[#allocation3] sm:$0xff]
      %v149 = vld [vmem:[#allocation4] sm:$0xff]
      %v150 = vrcp.pop %v149
      %v151 = vmul.f32 %v148, %v150
      %v152 = vld [vmem:[#allocation2] sm:$0xff]
      %v153 = vadd.f32 %v152, 1e-10
      %v154 = vlog2.pop %v153
      %v155 = vmul.f32 %v154, 0.6931472
      %v156 = vsub.f32 %v151, %v155
      %157 = vst.msk [vmem:[%s4] sm:$0xff] %vm128, %v156
    $region29: #{tpu_custom_call.1} parent=1 // pred_fallthru
      _
    // Predicated region
    $region30: #{tpu_custom_call.1} parent=1 // pred_check
      _
    $region31: #{tpu_custom_call.1} parent=1 // pred_check_branch
      %159 = sbr.rel (0) target = $region33
    $region32: #{tpu_custom_call.1} parent=1 // pred_region
      _
    $region33: #{tpu_custom_call.1} parent=1 // pred_fallthru
      _
    // Predicated region
    $region34: #{tpu_custom_call.1} parent=1 // pred_check
      _
    $region35: #{tpu_custom_call.1} parent=1 // pred_check_branch
      %161 = sbr.rel (0) target = $region37
    $region36: #{tpu_custom_call.1} parent=1 // pred_region
      _
    $region37: #{tpu_custom_call.1} parent=1 // pred_fallthru
      _
    %162 = vsyncpa [#allocation6], 1

</llo_original>
